<compile_context>
chip_gen: v6e
topology: v6e:2x2x1
jax: 0.10.0
libtpu: 0.0.40
codegen_flags: <defaults>
</compile_context>

<pallas_src>
import jax
import jax.numpy as jnp
from jax.experimental import pallas as pl
from jax.experimental.pallas import tpu as pltpu


def _prelu(x, a):
    return jnp.where(x > 0, x, a * x)


def cvno_kernel(
    # graph tensors
    edge_attr_ref, xr_t_ref, xi_t_ref, A_ref, inv_deg_ref, x_cat_ref,
    # fused real|imag edge MLP
    W1_ref, b1_ref, W2_ref, b2_ref, W3_ref, b3_ref, W4_ref, b4_ref,
    # per-lane PReLU alpha rows for the MLP
    a1_ref, a2_ref, a3_ref,
    # combined root weight / bias and output PReLU alpha row
    root_ref, bias_ref, aout_ref,
    # output: [N, 2C] = [real | imag]
    out_ref,
):
    C2 = xr_t_ref.shape[1]              # C*C
    C = out_ref.shape[1] // 2

    # ---- fused edge MLP: one pass produces [Wr | Wi] flattened, [E, 2*C*C] ----
    ea = edge_attr_ref[...]
    h = _prelu(jnp.dot(ea, W1_ref[...], preferred_element_type=jnp.float32) + b1_ref[...],
               a1_ref[...])
    h = _prelu(jnp.dot(h, W2_ref[...], preferred_element_type=jnp.float32) + b2_ref[...],
               a2_ref[...])
    h = _prelu(jnp.dot(h, W3_ref[...], preferred_element_type=jnp.float32) + b3_ref[...],
               a3_ref[...])
    Wcat = jnp.dot(h, W4_ref[...], preferred_element_type=jnp.float32) + b4_ref[...]

    Wr = Wcat[:, :C2]
    Wi = Wcat[:, C2:]

    # ---- per-edge complex messages, channel-major, fully lane-dense ----
    # xr_t / xi_t have X_tiled[e, c*C + d] = x[src[e], c]  (built in the wrapper)
    xr_t = xr_t_ref[...]
    xi_t = xi_t_ref[...]
    G_real = xr_t * Wr - xi_t * Wi                      # -> sum_c gives msg_rr - msg_ii
    G_imag = xi_t * Wr + xr_t * Wi                      # -> sum_c gives msg_ri + msg_ir
    G = jnp.concatenate([G_real, G_imag], axis=1)       # [E, 2*C*C]

    # ---- single aggregation matmul (scatter-sum as matmul), then exact 1/deg scale ----
    A = A_ref[...].astype(jnp.float32)                  # 0/1 bf16 -> f32 (exact)
    agg_wide = jnp.dot(A, G, preferred_element_type=jnp.float32)   # [N, 2*C*C]

    # reduce the source-channel axis: agg[n, d] = sum_c agg_wide[n, c*C + d]
    agg_real = agg_wide[:, 0:C]
    agg_imag = agg_wide[:, C2:C2 + C]
    for c in range(1, C2 // C):                         # static tiny loop (C-1 iters)
        agg_real = agg_real + agg_wide[:, c * C:(c + 1) * C]
        agg_imag = agg_imag + agg_wide[:, C2 + c * C:C2 + (c + 1) * C]
    agg = jnp.concatenate([agg_real, agg_imag], axis=1) * inv_deg_ref[...]   # [N, 2C]

    # ---- single combined root matmul + bias + per-lane output PReLU ----
    root_term = jnp.dot(x_cat_ref[...], root_ref[...], preferred_element_type=jnp.float32)
    out_ref[...] = _prelu(agg + root_term + bias_ref[...], aout_ref[...])


def cv_neural_op_forward(xr, xi, edge_index, edge_attr, dense, alphas):
    """Wrapper glue: gathers/tiles source features, builds the dense 0/1 aggregation
    matrix + inverse degree, fuses the real/imag parameters, and runs one Pallas call."""
    (rW1, rb1, rW2, rb2, rW3, rb3, rW4, rb4,
     iW1, ib1, iW2, ib2, iW3, ib3, iW4, ib4,
     root_r, bias_r, root_i, bias_i) = dense
    N, C = xr.shape
    K = rW1.shape[1]
    CC = C * C

    src, tgt = edge_index[0], edge_index[1]

    # lane-tiled gathered source features: X_tiled[e, c*C + d] = x[src[e], c]
    xr_tiled = jnp.repeat(xr[src], C, axis=1)           # [E, C*C]
    xi_tiled = jnp.repeat(xi[src], C, axis=1)

    # unnormalized 0/1 aggregation matrix (bf16 is exact for 0/1) + f32 inverse degree
    onehot = (tgt[None, :] == jnp.arange(N)[:, None]).astype(jnp.float32)   # [N, E]
    deg = onehot.sum(axis=1, keepdims=True)
    inv_deg = 1.0 / jnp.maximum(deg, 1.0)               # zero-degree rows -> sum is 0 anyway
    A01 = onehot.astype(jnp.bfloat16)

    x_cat = jnp.concatenate([xr, xi], axis=1)           # [N, 2C]

    # fused real|imag edge MLP parameters
    def blockdiag(a, b):
        za = jnp.zeros((a.shape[0], b.shape[1]), jnp.float32)
        zb = jnp.zeros((b.shape[0], a.shape[1]), jnp.float32)
        return jnp.block([[a, za], [zb, b]])

    W1c = jnp.concatenate([rW1, iW1], axis=1)                       # [F, 2K]
    b1c = jnp.concatenate([rb1, ib1], axis=1)
    W2c = blockdiag(rW2, iW2)                                       # [2K, 2K]
    b2c = jnp.concatenate([rb2, ib2], axis=1)
    W3c = blockdiag(rW3, iW3)
    b3c = jnp.concatenate([rb3, ib3], axis=1)
    W4c = blockdiag(rW4, iW4)                                       # [2K, 2*C*C]
    b4c = jnp.concatenate([rb4, ib4], axis=1)

    def lane_alpha(ar, ai, width):
        return jnp.concatenate([jnp.full((1, width), ar, jnp.float32),
                                jnp.full((1, width), ai, jnp.float32)], axis=1)

    a1row = lane_alpha(alphas[0], alphas[3], K)
    a2row = lane_alpha(alphas[1], alphas[4], K)
    a3row = lane_alpha(alphas[2], alphas[5], K)
    a_out = lane_alpha(alphas[6], alphas[7], C)

    # combined root weight / bias: [xr|xi] @ [[root_r, root_i], [-root_i, root_r]]
    root_blk = jnp.block([[root_r, root_i], [-root_i, root_r]])     # [2C, 2C]
    bias_cat = jnp.concatenate([bias_r - bias_i, bias_r + bias_i], axis=1)

    vmem = pl.BlockSpec(memory_space=pltpu.MemorySpace.VMEM)
    inputs = [edge_attr, xr_tiled, xi_tiled, A01, inv_deg, x_cat,
              W1c, b1c, W2c, b2c, W3c, b3c, W4c, b4c,
              a1row, a2row, a3row, root_blk, bias_cat, a_out]

    out_cat = pl.pallas_call(
        cvno_kernel,
        out_shape=jax.ShapeDtypeStruct((N, 2 * C), jnp.float32),
        in_specs=[vmem] * len(inputs),
        out_specs=vmem,
    )(*inputs)
    return out_cat[:, :C], out_cat[:, C:]


# ---------------- deterministic parameter init + pure-JAX reference ----------------

def _init_linear(key, fan_in, fan_out):
    k1, k2 = jax.random.split(key)
    bound = 1.0 / (fan_in ** 0.5)
    W = jax.random.uniform(k1, (fan_in, fan_out), jnp.float32, -bound, bound)
    b = jax.random.uniform(k2, (1, fan_out), jnp.float32, -bound, bound)
    return W, b


def init_params(key, C, K, F):
    ks = jax.random.split(key, 10)
    rW1, rb1 = _init_linear(ks[0], F, K)
    rW2, rb2 = _init_linear(ks[1], K, K)
    rW3, rb3 = _init_linear(ks[2], K, K)
    rW4, rb4 = _init_linear(ks[3], K, C * C)
    iW1, ib1 = _init_linear(ks[4], F, K)
    iW2, ib2 = _init_linear(ks[5], K, K)
    iW3, ib3 = _init_linear(ks[6], K, K)
    iW4, ib4 = _init_linear(ks[7], K, C * C)
    bound = 1.0 / (C ** 0.5)
    root_r = jax.random.uniform(ks[8], (C, C), jnp.float32, -bound, bound)
    root_i = jax.random.uniform(ks[9], (C, C), jnp.float32, -bound, bound)
    bias_r = jnp.zeros((1, C), jnp.float32)
    bias_i = jnp.zeros((1, C), jnp.float32)
    dense = [rW1, rb1, rW2, rb2, rW3, rb3, rW4, rb4,
             iW1, ib1, iW2, ib2, iW3, ib3, iW4, ib4,
             root_r, bias_r, root_i, bias_i]
    alphas = jnp.full((8,), 0.25, jnp.float32)    # PyTorch PReLU default init
    return dense, alphas


def reference_forward(xr, xi, edge_index, edge_attr, dense, alphas):
    (rW1, rb1, rW2, rb2, rW3, rb3, rW4, rb4,
     iW1, ib1, iW2, ib2, iW3, ib3, iW4, ib4,
     root_r, bias_r, root_i, bias_i) = dense
    N, C = xr.shape
    src, tgt = edge_index[0], edge_index[1]

    def mlp(W1, b1, a1, W2, b2, a2, W3, b3, a3, W4, b4):
        h = _prelu(edge_attr @ W1 + b1, a1)
        h = _prelu(h @ W2 + b2, a2)
        h = _prelu(h @ W3 + b3, a3)
        return (h @ W4 + b4).reshape(-1, C, C)

    Wr = mlp(rW1, rb1, alphas[0], rW2, rb2, alphas[1], rW3, rb3, alphas[2], rW4, rb4)
    Wi = mlp(iW1, ib1, alphas[3], iW2, ib2, alphas[4], iW3, ib3, alphas[5], iW4, ib4)

    def nnconv(x, W, root, bias):
        msg = jnp.einsum('ec,ecd->ed', x[src], W)
        summ = jnp.zeros((N, C), jnp.float32).at[tgt].add(msg)
        cnt = jnp.zeros((N,), jnp.float32).at[tgt].add(1.0)
        agg = summ / jnp.maximum(cnt, 1.0)[:, None]
        return agg + x @ root + bias

    rr = nnconv(xr, Wr, root_r, bias_r)
    ri = nnconv(xi, Wr, root_r, bias_r)
    ir = nnconv(xr, Wi, root_i, bias_i)
    ii = nnconv(xi, Wi, root_i, bias_i)
    return _prelu(rr - ii, alphas[6]), _prelu(ri + ir, alphas[7])


if __name__ == "__main__":
    key = jax.random.PRNGKey(0)
    C, K, F = 4, 32, 8           # transchannel, ker_width, edgefeasize
    N, E = 16, 48                # nodes, edges

    k_xr, k_xi, k_ea, k_src, k_tgt, k_par = jax.random.split(key, 6)
    xr = jax.random.normal(k_xr, (N, C), jnp.float32)
    xi = jax.random.normal(k_xi, (N, C), jnp.float32)
    edge_attr = jax.random.normal(k_ea, (E, F), jnp.float32)
    edge_index = jnp.stack([jax.random.randint(k_src, (E,), 0, N),
                            jax.random.randint(k_tgt, (E,), 0, N)]).astype(jnp.int32)

    dense, alphas = init_params(k_par, C, K, F)

    out_r, out_i = cv_neural_op_forward(xr, xi, edge_index, edge_attr, dense, alphas)
    jax.block_until_ready((out_r, out_i))

    ref_r, ref_i = reference_forward(xr, xi, edge_index, edge_attr, dense, alphas)
    assert bool(jnp.allclose(out_r, ref_r, atol=1e-4, rtol=1e-4)), "real output mismatch"
    assert bool(jnp.allclose(out_i, ref_i, atol=1e-4, rtol=1e-4)), "imag output mismatch"

    print("KERNEL_OK")
</pallas_src>

<mosaic_0001>
module attributes {stable_mosaic.version = 11 : i64} {
  func.func @cvno_kernel(%arg0: memref<48x8xf32, #tpu.memory_space<vmem>>, %arg1: memref<48x16xf32, #tpu.memory_space<vmem>>, %arg2: memref<48x16xf32, #tpu.memory_space<vmem>>, %arg3: memref<16x48xbf16, #tpu.memory_space<vmem>>, %arg4: memref<16x1xf32, #tpu.memory_space<vmem>>, %arg5: memref<16x8xf32, #tpu.memory_space<vmem>>, %arg6: memref<8x64xf32, #tpu.memory_space<vmem>>, %arg7: memref<1x64xf32, #tpu.memory_space<vmem>>, %arg8: memref<64x64xf32, #tpu.memory_space<vmem>>, %arg9: memref<1x64xf32, #tpu.memory_space<vmem>>, %arg10: memref<64x64xf32, #tpu.memory_space<vmem>>, %arg11: memref<1x64xf32, #tpu.memory_space<vmem>>, %arg12: memref<64x32xf32, #tpu.memory_space<vmem>>, %arg13: memref<1x32xf32, #tpu.memory_space<vmem>>, %arg14: memref<1x64xf32, #tpu.memory_space<vmem>>, %arg15: memref<1x64xf32, #tpu.memory_space<vmem>>, %arg16: memref<1x64xf32, #tpu.memory_space<vmem>>, %arg17: memref<8x8xf32, #tpu.memory_space<vmem>>, %arg18: memref<1x8xf32, #tpu.memory_space<vmem>>, %arg19: memref<1x8xf32, #tpu.memory_space<vmem>>, %arg20: memref<16x8xf32, #tpu.memory_space<vmem>>) attributes {dimension_semantics = [], scalar_prefetch = 0 : i64, scratch_operands = 0 : i64, tpu.core_type = #tpu.core_type<tc>} {
    %c0 = arith.constant 0 : index
    %c0_0 = arith.constant 0 : index
    %0 = vector.load %arg0[%c0, %c0_0] : memref<48x8xf32, #tpu.memory_space<vmem>>, vector<48x8xf32>
    %c0_1 = arith.constant 0 : index
    %c0_2 = arith.constant 0 : index
    %1 = vector.load %arg6[%c0_1, %c0_2] : memref<8x64xf32, #tpu.memory_space<vmem>>, vector<8x64xf32>
    %cst = arith.constant dense<0.000000e+00> : vector<48x64xf32>
    %2 = tpu.matmul %0, %1, %cst {dimension_numbers = #tpu.dot_dimension_numbers<[1], [0], [0], [1], [0, 0, 1, 1], [], []>} : vector<48x8xf32>, vector<8x64xf32>, vector<48x64xf32> -> vector<48x64xf32>
    %c0_3 = arith.constant 0 : index
    %c0_4 = arith.constant 0 : index
    %3 = vector.load %arg7[%c0_3, %c0_4] : memref<1x64xf32, #tpu.memory_space<vmem>>, vector<1x64xf32>
    %4 = vector.broadcast %3 : vector<1x64xf32> to vector<48x64xf32>
    %5 = arith.addf %2, %4 : vector<48x64xf32>
    %c0_5 = arith.constant 0 : index
    %c0_6 = arith.constant 0 : index
    %6 = vector.load %arg14[%c0_5, %c0_6] : memref<1x64xf32, #tpu.memory_space<vmem>>, vector<1x64xf32>
    %cst_7 = arith.constant 0.000000e+00 : f32
    %7 = vector.broadcast %cst_7 : f32 to vector<48x64xf32>
    %8 = arith.cmpf ogt, %5, %7 : vector<48x64xf32>
    %9 = vector.broadcast %6 : vector<1x64xf32> to vector<48x64xf32>
    %10 = arith.mulf %9, %5 : vector<48x64xf32>
    %11 = arith.select %8, %5, %10 : vector<48x64xi1>, vector<48x64xf32>
    %c0_8 = arith.constant 0 : index
    %c0_9 = arith.constant 0 : index
    %12 = vector.load %arg8[%c0_8, %c0_9] : memref<64x64xf32, #tpu.memory_space<vmem>>, vector<64x64xf32>
    %cst_10 = arith.constant dense<0.000000e+00> : vector<48x64xf32>
    %13 = tpu.matmul %11, %12, %cst_10 {dimension_numbers = #tpu.dot_dimension_numbers<[1], [0], [0], [1], [0, 0, 1, 1], [], []>} : vector<48x64xf32>, vector<64x64xf32>, vector<48x64xf32> -> vector<48x64xf32>
    %c0_11 = arith.constant 0 : index
    %c0_12 = arith.constant 0 : index
    %14 = vector.load %arg9[%c0_11, %c0_12] : memref<1x64xf32, #tpu.memory_space<vmem>>, vector<1x64xf32>
    %15 = vector.broadcast %14 : vector<1x64xf32> to vector<48x64xf32>
    %16 = arith.addf %13, %15 : vector<48x64xf32>
    %c0_13 = arith.constant 0 : index
    %c0_14 = arith.constant 0 : index
    %17 = vector.load %arg15[%c0_13, %c0_14] : memref<1x64xf32, #tpu.memory_space<vmem>>, vector<1x64xf32>
    %cst_15 = arith.constant 0.000000e+00 : f32
    %18 = vector.broadcast %cst_15 : f32 to vector<48x64xf32>
    %19 = arith.cmpf ogt, %16, %18 : vector<48x64xf32>
    %20 = vector.broadcast %17 : vector<1x64xf32> to vector<48x64xf32>
    %21 = arith.mulf %20, %16 : vector<48x64xf32>
    %22 = arith.select %19, %16, %21 : vector<48x64xi1>, vector<48x64xf32>
    %c0_16 = arith.constant 0 : index
    %c0_17 = arith.constant 0 : index
    %23 = vector.load %arg10[%c0_16, %c0_17] : memref<64x64xf32, #tpu.memory_space<vmem>>, vector<64x64xf32>
    %cst_18 = arith.constant dense<0.000000e+00> : vector<48x64xf32>
    %24 = tpu.matmul %22, %23, %cst_18 {dimension_numbers = #tpu.dot_dimension_numbers<[1], [0], [0], [1], [0, 0, 1, 1], [], []>} : vector<48x64xf32>, vector<64x64xf32>, vector<48x64xf32> -> vector<48x64xf32>
    %c0_19 = arith.constant 0 : index
    %c0_20 = arith.constant 0 : index
    %25 = vector.load %arg11[%c0_19, %c0_20] : memref<1x64xf32, #tpu.memory_space<vmem>>, vector<1x64xf32>
    %26 = vector.broadcast %25 : vector<1x64xf32> to vector<48x64xf32>
    %27 = arith.addf %24, %26 : vector<48x64xf32>
    %c0_21 = arith.constant 0 : index
    %c0_22 = arith.constant 0 : index
    %28 = vector.load %arg16[%c0_21, %c0_22] : memref<1x64xf32, #tpu.memory_space<vmem>>, vector<1x64xf32>
    %cst_23 = arith.constant 0.000000e+00 : f32
    %29 = vector.broadcast %cst_23 : f32 to vector<48x64xf32>
    %30 = arith.cmpf ogt, %27, %29 : vector<48x64xf32>
    %31 = vector.broadcast %28 : vector<1x64xf32> to vector<48x64xf32>
    %32 = arith.mulf %31, %27 : vector<48x64xf32>
    %33 = arith.select %30, %27, %32 : vector<48x64xi1>, vector<48x64xf32>
    %c0_24 = arith.constant 0 : index
    %c0_25 = arith.constant 0 : index
    %34 = vector.load %arg12[%c0_24, %c0_25] : memref<64x32xf32, #tpu.memory_space<vmem>>, vector<64x32xf32>
    %cst_26 = arith.constant dense<0.000000e+00> : vector<48x32xf32>
    %35 = tpu.matmul %33, %34, %cst_26 {dimension_numbers = #tpu.dot_dimension_numbers<[1], [0], [0], [1], [0, 0, 1, 1], [], []>} : vector<48x64xf32>, vector<64x32xf32>, vector<48x32xf32> -> vector<48x32xf32>
    %c0_27 = arith.constant 0 : index
    %c0_28 = arith.constant 0 : index
    %36 = vector.load %arg13[%c0_27, %c0_28] : memref<1x32xf32, #tpu.memory_space<vmem>>, vector<1x32xf32>
    %37 = vector.broadcast %36 : vector<1x32xf32> to vector<48x32xf32>
    %38 = arith.addf %35, %37 : vector<48x32xf32>
    %39 = vector.extract_strided_slice %38 {offsets = [0, 0], sizes = [48, 16], strides = [1, 1]} : vector<48x32xf32> to vector<48x16xf32>
    %40 = vector.extract_strided_slice %38 {offsets = [0, 16], sizes = [48, 16], strides = [1, 1]} : vector<48x32xf32> to vector<48x16xf32>
    %c0_29 = arith.constant 0 : index
    %c0_30 = arith.constant 0 : index
    %41 = vector.load %arg1[%c0_29, %c0_30] : memref<48x16xf32, #tpu.memory_space<vmem>>, vector<48x16xf32>
    %c0_31 = arith.constant 0 : index
    %c0_32 = arith.constant 0 : index
    %42 = vector.load %arg2[%c0_31, %c0_32] : memref<48x16xf32, #tpu.memory_space<vmem>>, vector<48x16xf32>
    %43 = arith.mulf %41, %39 : vector<48x16xf32>
    %44 = arith.mulf %42, %40 : vector<48x16xf32>
    %45 = arith.subf %43, %44 : vector<48x16xf32>
    %46 = arith.mulf %42, %39 : vector<48x16xf32>
    %47 = arith.mulf %41, %40 : vector<48x16xf32>
    %48 = arith.addf %46, %47 : vector<48x16xf32>
    %49 = tpu.concatenate %45, %48 in 1 : vector<48x16xf32>, vector<48x16xf32> -> vector<48x32xf32>
    %c0_33 = arith.constant 0 : index
    %c0_34 = arith.constant 0 : index
    %50 = vector.load %arg3[%c0_33, %c0_34] : memref<16x48xbf16, #tpu.memory_space<vmem>>, vector<16x48xbf16>
    %51 = arith.extf %50 : vector<16x48xbf16> to vector<16x48xf32>
    %cst_35 = arith.constant dense<0.000000e+00> : vector<16x32xf32>
    %52 = tpu.matmul %51, %49, %cst_35 {dimension_numbers = #tpu.dot_dimension_numbers<[1], [0], [0], [1], [0, 0, 1, 1], [], []>} : vector<16x48xf32>, vector<48x32xf32>, vector<16x32xf32> -> vector<16x32xf32>
    %53 = vector.extract_strided_slice %52 {offsets = [0, 0], sizes = [16, 4], strides = [1, 1]} : vector<16x32xf32> to vector<16x4xf32>
    %54 = vector.extract_strided_slice %52 {offsets = [0, 16], sizes = [16, 4], strides = [1, 1]} : vector<16x32xf32> to vector<16x4xf32>
    %55 = vector.extract_strided_slice %52 {offsets = [0, 4], sizes = [16, 4], strides = [1, 1]} : vector<16x32xf32> to vector<16x4xf32>
    %56 = arith.addf %53, %55 : vector<16x4xf32>
    %57 = vector.extract_strided_slice %52 {offsets = [0, 20], sizes = [16, 4], strides = [1, 1]} : vector<16x32xf32> to vector<16x4xf32>
    %58 = arith.addf %54, %57 : vector<16x4xf32>
    %59 = vector.extract_strided_slice %52 {offsets = [0, 8], sizes = [16, 4], strides = [1, 1]} : vector<16x32xf32> to vector<16x4xf32>
    %60 = arith.addf %56, %59 : vector<16x4xf32>
    %61 = vector.extract_strided_slice %52 {offsets = [0, 24], sizes = [16, 4], strides = [1, 1]} : vector<16x32xf32> to vector<16x4xf32>
    %62 = arith.addf %58, %61 : vector<16x4xf32>
    %63 = vector.extract_strided_slice %52 {offsets = [0, 12], sizes = [16, 4], strides = [1, 1]} : vector<16x32xf32> to vector<16x4xf32>
    %64 = arith.addf %60, %63 : vector<16x4xf32>
    %65 = vector.extract_strided_slice %52 {offsets = [0, 28], sizes = [16, 4], strides = [1, 1]} : vector<16x32xf32> to vector<16x4xf32>
    %66 = arith.addf %62, %65 : vector<16x4xf32>
    %67 = tpu.concatenate %64, %66 in 1 : vector<16x4xf32>, vector<16x4xf32> -> vector<16x8xf32>
    %c0_36 = arith.constant 0 : index
    %c0_37 = arith.constant 0 : index
    %68 = vector.load %arg4[%c0_36, %c0_37] : memref<16x1xf32, #tpu.memory_space<vmem>>, vector<16x1xf32>
    %69 = vector.broadcast %68 : vector<16x1xf32> to vector<16x8xf32>
    %70 = arith.mulf %67, %69 : vector<16x8xf32>
    %c0_38 = arith.constant 0 : index
    %c0_39 = arith.constant 0 : index
    %71 = vector.load %arg5[%c0_38, %c0_39] : memref<16x8xf32, #tpu.memory_space<vmem>>, vector<16x8xf32>
    %c0_40 = arith.constant 0 : index
    %c0_41 = arith.constant 0 : index
    %72 = vector.load %arg17[%c0_40, %c0_41] : memref<8x8xf32, #tpu.memory_space<vmem>>, vector<8x8xf32>
    %cst_42 = arith.constant dense<0.000000e+00> : vector<16x8xf32>
    %73 = tpu.matmul %71, %72, %cst_42 {dimension_numbers = #tpu.dot_dimension_numbers<[1], [0], [0], [1], [0, 0, 1, 1], [], []>} : vector<16x8xf32>, vector<8x8xf32>, vector<16x8xf32> -> vector<16x8xf32>
    %74 = arith.addf %70, %73 : vector<16x8xf32>
    %c0_43 = arith.constant 0 : index
    %c0_44 = arith.constant 0 : index
    %75 = vector.load %arg18[%c0_43, %c0_44] : memref<1x8xf32, #tpu.memory_space<vmem>>, vector<1x8xf32>
    %76 = vector.broadcast %75 : vector<1x8xf32> to vector<16x8xf32>
    %77 = arith.addf %74, %76 : vector<16x8xf32>
    %c0_45 = arith.constant 0 : index
    %c0_46 = arith.constant 0 : index
    %78 = vector.load %arg19[%c0_45, %c0_46] : memref<1x8xf32, #tpu.memory_space<vmem>>, vector<1x8xf32>
    %cst_47 = arith.constant 0.000000e+00 : f32
    %79 = vector.broadcast %cst_47 : f32 to vector<16x8xf32>
    %80 = arith.cmpf ogt, %77, %79 : vector<16x8xf32>
    %81 = vector.broadcast %78 : vector<1x8xf32> to vector<16x8xf32>
    %82 = arith.mulf %81, %77 : vector<16x8xf32>
    %83 = arith.select %80, %77, %82 : vector<16x8xi1>, vector<16x8xf32>
    %c0_48 = arith.constant 0 : index
    %c0_49 = arith.constant 0 : index
    %84 = vector.load %arg20[%c0_48, %c0_49] : memref<16x8xf32, #tpu.memory_space<vmem>>, vector<16x8xf32>
    tpu.vector_store %arg20[%c0_48, %c0_49], %83 {strides = array<i32>} : memref<16x8xf32, #tpu.memory_space<vmem>>, vector<16x8xf32>,
    return
  }
}

</mosaic_0001>

<llo_original>
// kernel: tpu_custom_call.1
$region0: #{tpu_custom_call.1}
  #allocation0 [shape = 'u32[]', space=smem, size = 0x4, offset = 0x4, fixed_abs, tag = 'smem constant byte address 0x4 - core index']
  #allocation1 [shape = 'u32[144,128]{1,0:T(1,128)}', space=vmem, size = 0x12000, scoped, tag = 'internal scratch']
  %s0 = inlined_call_operand.vmem [shape: f32[48,8], index: 0, kind: input, shape index: {}]
  %s1 = inlined_call_operand.vmem [shape: f32[48,16], index: 1, kind: input, shape index: {}]
  %s2 = inlined_call_operand.vmem [shape: f32[48,16], index: 2, kind: input, shape index: {}]
  %s3 = inlined_call_operand.vmem [shape: bf16[16,48], index: 3, kind: input, shape index: {}]
  %s4 = inlined_call_operand.vmem [shape: f32[16,1], index: 4, kind: input, shape index: {}]
  %s5 = inlined_call_operand.vmem [shape: f32[16,8], index: 5, kind: input, shape index: {}]
  %s6 = inlined_call_operand.vmem [shape: f32[8,64], index: 6, kind: input, shape index: {}]
  %s7 = inlined_call_operand.vmem [shape: f32[1,64], index: 7, kind: input, shape index: {}]
  %s8 = inlined_call_operand.vmem [shape: f32[64,64], index: 8, kind: input, shape index: {}]
  %s9 = inlined_call_operand.vmem [shape: f32[1,64], index: 9, kind: input, shape index: {}]
  %s10 = inlined_call_operand.vmem [shape: f32[64,64], index: 10, kind: input, shape index: {}]
  %s11 = inlined_call_operand.vmem [shape: f32[1,64], index: 11, kind: input, shape index: {}]
  %s12 = inlined_call_operand.vmem [shape: f32[64,32], index: 12, kind: input, shape index: {}]
  %s13 = inlined_call_operand.vmem [shape: f32[1,32], index: 13, kind: input, shape index: {}]
  %s14 = inlined_call_operand.vmem [shape: f32[1,64], index: 14, kind: input, shape index: {}]
  %s15 = inlined_call_operand.vmem [shape: f32[1,64], index: 15, kind: input, shape index: {}]
  %s16 = inlined_call_operand.vmem [shape: f32[1,64], index: 16, kind: input, shape index: {}]
  %s17 = inlined_call_operand.vmem [shape: f32[8,8], index: 17, kind: input, shape index: {}]
  %s18 = inlined_call_operand.vmem [shape: f32[1,8], index: 18, kind: input, shape index: {}]
  %s19 = inlined_call_operand.vmem [shape: f32[1,8], index: 19, kind: input, shape index: {}]
  %s20 = inlined_call_operand.vmem [shape: f32[16,8], index: 20, kind: output, shape index: {}]
  %s21 = sld [smem:[#allocation0]]
  $region90: #{tpu_custom_call.1} parent=0
    _
  %s23 = ssub.s32 1, %s21
  %s24 = scalar_select 0, %s23, %s21
  // Predicated region
  $region2: #{tpu_custom_call.1} parent=0 // pred_check
    _
  $region3: #{tpu_custom_call.1} parent=0 // pred_check_branch
    %26 = sbr.rel (0) target = $region5
  $region4: #{tpu_custom_call.1} parent=0 // pred_region
    _
  $region5: #{tpu_custom_call.1} parent=0 // pred_fallthru
    _
  // Predicated region
  $region6: #{tpu_custom_call.1} parent=0 // pred_check
    _
  $region7: #{tpu_custom_call.1} parent=0 // pred_check_branch
    %28 = sbr.rel (0) target = $region9
  $region8: #{tpu_custom_call.1} parent=0 // pred_region
    _
  $region9: #{tpu_custom_call.1} parent=0 // pred_fallthru
    _
  // Predicated region
  $region10: #{tpu_custom_call.1} parent=0 // pred_check
    _
  $region11: #{tpu_custom_call.1} parent=0 // pred_check_branch
    %30 = sbr.rel (0) target = $region13
  $region12: #{tpu_custom_call.1} parent=0 // pred_region
    _
  $region13: #{tpu_custom_call.1} parent=0 // pred_fallthru
    _
  // Predicated region
  $region14: #{tpu_custom_call.1} parent=0 // pred_check
    _
  $region15: #{tpu_custom_call.1} parent=0 // pred_check_branch
    %32 = sbr.rel (0) target = $region17
  $region16: #{tpu_custom_call.1} parent=0 // pred_region
    _
  $region17: #{tpu_custom_call.1} parent=0 // pred_fallthru
    _
  // Predicated region
  $region18: #{tpu_custom_call.1} parent=0 // pred_check
    _
  $region19: #{tpu_custom_call.1} parent=0 // pred_check_branch
    %34 = sbr.rel (0) target = $region21
  $region20: #{tpu_custom_call.1} parent=0 // pred_region
    _
  $region21: #{tpu_custom_call.1} parent=0 // pred_fallthru
    _
  // Predicated region
  $region22: #{tpu_custom_call.1} parent=0 // pred_check
    _
  $region23: #{tpu_custom_call.1} parent=0 // pred_check_branch
    %36 = sbr.rel (0) target = $region25
  $region24: #{tpu_custom_call.1} parent=0 // pred_region
    _
  $region25: #{tpu_custom_call.1} parent=0 // pred_fallthru
    _
  // Predicated region
  $region26: #{tpu_custom_call.1} parent=0 // pred_check
    _
  $region27: #{tpu_custom_call.1} parent=0 // pred_check_branch
    %38 = sbr.rel (0) target = $region29
  $region28: #{tpu_custom_call.1} parent=0 // pred_region
    _
  $region29: #{tpu_custom_call.1} parent=0 // pred_fallthru
    _
  // Predicated region
  $region30: #{tpu_custom_call.1} parent=0 // pred_check
    _
  $region31: #{tpu_custom_call.1} parent=0 // pred_check_branch
    %40 = sbr.rel (0) target = $region33
  $region32: #{tpu_custom_call.1} parent=0 // pred_region
    _
  $region33: #{tpu_custom_call.1} parent=0 // pred_fallthru
    _
  // Predicated region
  $region34: #{tpu_custom_call.1} parent=0 // pred_check
    _
  $region35: #{tpu_custom_call.1} parent=0 // pred_check_branch
    %42 = sbr.rel (0) target = $region37
  $region36: #{tpu_custom_call.1} parent=0 // pred_region
    _
  $region37: #{tpu_custom_call.1} parent=0 // pred_fallthru
    _
  // Predicated region
  $region38: #{tpu_custom_call.1} parent=0 // pred_check
    _
  $region39: #{tpu_custom_call.1} parent=0 // pred_check_branch
    %44 = sbr.rel (0) target = $region41
  $region40: #{tpu_custom_call.1} parent=0 // pred_region
    _
  $region41: #{tpu_custom_call.1} parent=0 // pred_fallthru
    _
  // Predicated region
  $region42: #{tpu_custom_call.1} parent=0 // pred_check
    _
  $region43: #{tpu_custom_call.1} parent=0 // pred_check_branch
    %46 = sbr.rel (0) target = $region45
  $region44: #{tpu_custom_call.1} parent=0 // pred_region
    _
  $region45: #{tpu_custom_call.1} parent=0 // pred_fallthru
    _
  // Predicated region
  $region46: #{tpu_custom_call.1} parent=0 // pred_check
    _
  $region47: #{tpu_custom_call.1} parent=0 // pred_check_branch
    %48 = sbr.rel (0) target = $region49
  $region48: #{tpu_custom_call.1} parent=0 // pred_region
    _
  $region49: #{tpu_custom_call.1} parent=0 // pred_fallthru
    _
  // Predicated region
  $region50: #{tpu_custom_call.1} parent=0 // pred_check
    _
  $region51: #{tpu_custom_call.1} parent=0 // pred_check_branch
    %50 = sbr.rel (0) target = $region53
  $region52: #{tpu_custom_call.1} parent=0 // pred_region
    _
  $region53: #{tpu_custom_call.1} parent=0 // pred_fallthru
    _
  // Predicated region
  $region54: #{tpu_custom_call.1} parent=0 // pred_check
    _
  $region55: #{tpu_custom_call.1} parent=0 // pred_check_branch
    %52 = sbr.rel (0) target = $region57
  $region56: #{tpu_custom_call.1} parent=0 // pred_region
    _
  $region57: #{tpu_custom_call.1} parent=0 // pred_fallthru
    _
  // Predicated region
  $region58: #{tpu_custom_call.1} parent=0 // pred_check
    _
  $region59: #{tpu_custom_call.1} parent=0 // pred_check_branch
    %54 = sbr.rel (0) target = $region61
  $region60: #{tpu_custom_call.1} parent=0 // pred_region
    _
  $region61: #{tpu_custom_call.1} parent=0 // pred_fallthru
    _
  // Predicated region
  $region62: #{tpu_custom_call.1} parent=0 // pred_check
    _
  $region63: #{tpu_custom_call.1} parent=0 // pred_check_branch
    %56 = sbr.rel (0) target = $region65
  $region64: #{tpu_custom_call.1} parent=0 // pred_region
    _
  $region65: #{tpu_custom_call.1} parent=0 // pred_fallthru
    _
  // Predicated region
  $region66: #{tpu_custom_call.1} parent=0 // pred_check
    _
  $region67: #{tpu_custom_call.1} parent=0 // pred_check_branch
    %58 = sbr.rel (0) target = $region69
  $region68: #{tpu_custom_call.1} parent=0 // pred_region
    _
  $region69: #{tpu_custom_call.1} parent=0 // pred_fallthru
    _
  // Predicated region
  $region70: #{tpu_custom_call.1} parent=0 // pred_check
    _
  $region71: #{tpu_custom_call.1} parent=0 // pred_check_branch
    %60 = sbr.rel (0) target = $region73
  $region72: #{tpu_custom_call.1} parent=0 // pred_region
    _
  $region73: #{tpu_custom_call.1} parent=0 // pred_fallthru
    _
  // Predicated region
  $region74: #{tpu_custom_call.1} parent=0 // pred_check
    _
  $region75: #{tpu_custom_call.1} parent=0 // pred_check_branch
    %62 = sbr.rel (0) target = $region77
  $region76: #{tpu_custom_call.1} parent=0 // pred_region
    _
  $region77: #{tpu_custom_call.1} parent=0 // pred_fallthru
    _
  // Predicated region
  $region78: #{tpu_custom_call.1} parent=0 // pred_check
    _
  $region79: #{tpu_custom_call.1} parent=0 // pred_check_branch
    %64 = sbr.rel (0) target = $region81
  $region80: #{tpu_custom_call.1} parent=0 // pred_region
    _
  $region81: #{tpu_custom_call.1} parent=0 // pred_fallthru
    _
  %v65 = vld [vmem:[%s0] sm:$0xff]
  %v66 = vld [vmem:[%s0 + $0x8] sm:$0xff]
  %v67 = vld [vmem:[%s0 + $0x10] sm:$0xff]
  %v68 = vld [vmem:[%s0 + $0x18] sm:$0xff]
  %v69 = vld [vmem:[%s0 + $0x20] sm:$0xff]
  %v70 = vld [vmem:[%s0 + $0x28] sm:$0xff]
  %v71 = vld [vmem:[%s6] sm:$0xff]
  %v72 = vld [vmem:[%s7] sm:$0x1]
  %v74 = vlaneseq
  %v75 = vshrl.u32 %v74, 7
  %v76 = vsub.s32 0, %v75
  %v77 = vrot.slane %v72, %v76
  %vm79 = vcmask 64512
  %v81 = vsel %vm79, %v65, 0
  %v84 = vsel %vm79, %v66, 0
  %v87 = vsel %vm79, %v67, 0
  %v90 = vsel %vm79, %v68, 0
  %v93 = vsel %vm79, %v69, 0
  %v96 = vsel %vm79, %v70, 0
  %98 = vmatprep.subr.mxu0 0.0
  %99 = vmatpush1.msra.mxu0 0.0
  %100 = vmatprep.subr.mxu0 0.0
  %101 = vmatpush1.msra.mxu0 0.0
  %102 = vmatprep.subr.mxu0 0.0
  %103 = vmatpush1.msra.mxu0 0.0
  %104 = vmatprep.subr.mxu0 0.0
  %105 = vmatpush1.msra.mxu0 0.0
  %106 = vmatprep.subr.mxu0 0.0
  %107 = vmatpush1.msra.mxu0 0.0
  %108 = vmatprep.subr.mxu0 0.0
  %109 = vmatpush1.msra.mxu0 0.0
  %110 = vmatprep.subr.mxu0 0.0
  %111 = vmatpush1.msra.mxu0 0.0
  %112 = vmatprep.subr.mxu0 0.0
  %113 = vmatpush1.msra.mxu0 0.0
  %114 = vmatprep.subr.mxu0 0.0
  %115 = vmatpush1.msra.mxu0 0.0
  %116 = vmatprep.subr.mxu0 0.0
  %117 = vmatpush1.msra.mxu0 0.0
  %118 = vmatprep.subr.mxu0 0.0
  %119 = vmatpush1.msra.mxu0 0.0
  %120 = vmatprep.subr.mxu0 0.0
  %121 = vmatpush1.msra.mxu0 0.0
  %122 = vmatprep.subr.mxu0 0.0
  %123 = vmatpush1.msra.mxu0 0.0
  %124 = vmatprep.subr.mxu0 0.0
  %125 = vmatpush1.msra.mxu0 0.0
  %126 = vmatprep.subr.mxu0 0.0
  %127 = vmatpush1.msra.mxu0 0.0
  %128 = vmatprep.subr.mxu0 0.0
  %129 = vmatpush1.msra.mxu0 %v71
  %130 = vmatprep.subr.mxu0 0.0
  %131 = vmatpush2.msra.mxu0 0.0
  %132 = vmatprep.subr.mxu0 0.0
  %133 = vmatpush2.msra.mxu0 0.0
  %134 = vmatprep.subr.mxu0 0.0
  %135 = vmatpush2.msra.mxu0 0.0
  %136 = vmatprep.subr.mxu0 0.0
  %137 = vmatpush2.msra.mxu0 0.0
  %138 = vmatprep.subr.mxu0 0.0
  %139 = vmatpush2.msra.mxu0 0.0
  %140 = vmatprep.subr.mxu0 0.0
  %141 = vmatpush2.msra.mxu0 0.0
  %142 = vmatprep.subr.mxu0 0.0
  %143 = vmatpush2.msra.mxu0 0.0
  %144 = vmatprep.subr.mxu0 0.0
  %145 = vmatpush2.msra.mxu0 0.0
  %146 = vmatprep.subr.mxu0 0.0
  %147 = vmatpush2.msra.mxu0 0.0
  %148 = vmatprep.subr.mxu0 0.0
  %149 = vmatpush2.msra.mxu0 0.0
  %150 = vmatprep.subr.mxu0 0.0
  %151 = vmatpush2.msra.mxu0 0.0
  %152 = vmatprep.subr.mxu0 0.0
  %153 = vmatpush2.msra.mxu0 0.0
  %154 = vmatprep.subr.mxu0 0.0
  %155 = vmatpush2.msra.mxu0 0.0
  %156 = vmatprep.subr.mxu0 0.0
  %157 = vmatpush2.msra.mxu0 0.0
  %158 = vmatprep.subr.mxu0 0.0
  %159 = vmatpush2.msra.mxu0 0.0
  %160 = vmatprep.subr.mxu0 0.0
  %161 = vmatpush2.msra.mxu0 0.0
  %162 = vmatprep.mubr.f32.mxu0 0.0
  %163 = vmatmul.mubr.f32.gmra.mxu0 %v81
  %v164 = vpop.f32.mrf.mxu0
  %v165 = vadd.f32 %v77, %v164
  %v166 = vpop.f32.mrf.mxu0
  %167 = vmatprep.mubr.f32.mxu0 0.0
  %168 = vmatmul.mubr.f32.gmra.mxu0 %v84
  %v169 = vpop.f32.mrf.mxu0
  %v170 = vadd.f32 %v77, %v169
  %v171 = vpop.f32.mrf.mxu0
  %172 = vmatprep.mubr.f32.mxu0 0.0
  %173 = vmatmul.mubr.f32.gmra.mxu0 %v87
  %v174 = vpop.f32.mrf.mxu0
  %v175 = vadd.f32 %v77, %v174
  %v176 = vpop.f32.mrf.mxu0
  %177 = vmatprep.mubr.f32.mxu0 0.0
  %178 = vmatmul.mubr.f32.gmra.mxu0 %v90
  %v179 = vpop.f32.mrf.mxu0
  %v180 = vadd.f32 %v77, %v179
  %v181 = vpop.f32.mrf.mxu0
  %182 = vmatprep.mubr.f32.mxu0 0.0
  %183 = vmatmul.mubr.f32.gmra.mxu0 %v93
  %v184 = vpop.f32.mrf.mxu0
  %v185 = vadd.f32 %v77, %v184
  %v186 = vpop.f32.mrf.mxu0
  %187 = vmatprep.mubr.f32.mxu0 0.0
  %188 = vmatmul.mubr.f32.gmra.mxu0 %v96
  %v189 = vpop.f32.mrf.mxu0
  %v190 = vadd.f32 %v77, %v189
  %v191 = vpop.f32.mrf.mxu0
  %192 = vdwg.mxu0
  %v193 = vld [vmem:[%s14] sm:$0x1]
  %vm194 = vcmp.gt.f32.partialorder %v165, 0.0
  %vm195 = vcmp.gt.f32.partialorder %v170, 0.0
  %vm196 = vcmp.gt.f32.partialorder %v175, 0.0
  %vm197 = vcmp.gt.f32.partialorder %v180, 0.0
  %vm198 = vcmp.gt.f32.partialorder %v185, 0.0
  %vm199 = vcmp.gt.f32.partialorder %v190, 0.0
  %v201 = vlaneseq
  %v202 = vshrl.u32 %v201, 7
  %v203 = vsub.s32 0, %v202
  %v204 = vrot.slane %v193, %v203
  %v206 = vmul.f32 %v204, %v165
  %v207 = vmul.f32 %v204, %v170
  %v208 = vmul.f32 %v204, %v175
  %v209 = vmul.f32 %v204, %v180
  %v210 = vmul.f32 %v204, %v185
  %v211 = vmul.f32 %v204, %v190
  %v212 = vsel %vm194, %v165, %v206
  %v213 = vsel %vm195, %v170, %v207
  %v214 = vsel %vm196, %v175, %v208
  %v215 = vsel %vm197, %v180, %v209
  %v216 = vsel %vm198, %v185, %v210
  %v217 = vsel %vm199, %v190, %v211
  %v218 = vld [vmem:[%s8] sm:$0xff]
  %v219 = vld [vmem:[%s8 + $0x8] sm:$0xff]
  %v220 = vld [vmem:[%s8 + $0x10] sm:$0xff]
  %v221 = vld [vmem:[%s8 + $0x18] sm:$0xff]
  %v222 = vld [vmem:[%s8 + $0x20] sm:$0xff]
  %v223 = vld [vmem:[%s8 + $0x28] sm:$0xff]
  %v224 = vld [vmem:[%s8 + $0x30] sm:$0xff]
  %v225 = vld [vmem:[%s8 + $0x38] sm:$0xff]
  %v226 = vld [vmem:[%s9] sm:$0x1]
  %v228 = vlaneseq
  %v229 = vshrl.u32 %v228, 7
  %v230 = vsub.s32 0, %v229
  %v231 = vrot.slane %v226, %v230
  %vm233 = vcmask 523264
  %v235 = vsel %vm233, %v212, 0
  %v238 = vsel %vm233, %v213, 0
  %v241 = vsel %vm233, %v214, 0
  %v244 = vsel %vm233, %v215, 0
  %v247 = vsel %vm233, %v216, 0
  %v250 = vsel %vm233, %v217, 0
  %252 = vmatprep.subr.mxu0 0.0
  %253 = vmatpush1.msra.mxu0 0.0
  %254 = vmatprep.subr.mxu0 0.0
  %255 = vmatpush1.msra.mxu0 0.0
  %256 = vmatprep.subr.mxu0 0.0
  %257 = vmatpush1.msra.mxu0 0.0
  %258 = vmatprep.subr.mxu0 0.0
  %259 = vmatpush1.msra.mxu0 0.0
  %260 = vmatprep.subr.mxu0 0.0
  %261 = vmatpush1.msra.mxu0 0.0
  %262 = vmatprep.subr.mxu0 0.0
  %263 = vmatpush1.msra.mxu0 0.0
  %264 = vmatprep.subr.mxu0 0.0
  %265 = vmatpush1.msra.mxu0 0.0
  %266 = vmatprep.subr.mxu0 0.0
  %267 = vmatpush1.msra.mxu0 0.0
  %268 = vmatprep.subr.mxu0 0.0
  %269 = vmatpush1.msra.mxu0 %v225
  %270 = vmatprep.subr.mxu0 0.0
  %271 = vmatpush1.msra.mxu0 %v224
  %272 = vmatprep.subr.mxu0 0.0
  %273 = vmatpush1.msra.mxu0 %v223
  %274 = vmatprep.subr.mxu0 0.0
  %275 = vmatpush1.msra.mxu0 %v222
  %276 = vmatprep.subr.mxu0 0.0
  %277 = vmatpush1.msra.mxu0 %v221
  %278 = vmatprep.subr.mxu0 0.0
  %279 = vmatpush1.msra.mxu0 %v220
  %280 = vmatprep.subr.mxu0 0.0
  %281 = vmatpush1.msra.mxu0 %v219
  %282 = vmatprep.subr.mxu0 0.0
  %283 = vmatpush1.msra.mxu0 %v218
  %284 = vmatprep.subr.mxu0 0.0
  %285 = vmatpush2.msra.mxu0 0.0
  %286 = vmatprep.subr.mxu0 0.0
  %287 = vmatpush2.msra.mxu0 0.0
  %288 = vmatprep.subr.mxu0 0.0
  %289 = vmatpush2.msra.mxu0 0.0
  %290 = vmatprep.subr.mxu0 0.0
  %291 = vmatpush2.msra.mxu0 0.0
  %292 = vmatprep.subr.mxu0 0.0
  %293 = vmatpush2.msra.mxu0 0.0
  %294 = vmatprep.subr.mxu0 0.0
  %295 = vmatpush2.msra.mxu0 0.0
  %296 = vmatprep.subr.mxu0 0.0
  %297 = vmatpush2.msra.mxu0 0.0
  %298 = vmatprep.subr.mxu0 0.0
  %299 = vmatpush2.msra.mxu0 0.0
  %300 = vmatprep.subr.mxu0 0.0
  %301 = vmatpush2.msra.mxu0 0.0
  %302 = vmatprep.subr.mxu0 0.0
  %303 = vmatpush2.msra.mxu0 0.0
  %304 = vmatprep.subr.mxu0 0.0
  %305 = vmatpush2.msra.mxu0 0.0
  %306 = vmatprep.subr.mxu0 0.0
  %307 = vmatpush2.msra.mxu0 0.0
  %308 = vmatprep.subr.mxu0 0.0
  %309 = vmatpush2.msra.mxu0 0.0
  %310 = vmatprep.subr.mxu0 0.0
  %311 = vmatpush2.msra.mxu0 0.0
  %312 = vmatprep.subr.mxu0 0.0
  %313 = vmatpush2.msra.mxu0 0.0
  %314 = vmatprep.subr.mxu0 0.0
  %315 = vmatpush2.msra.mxu0 0.0
  %316 = vmatprep.mubr.f32.mxu0 0.0
  %317 = vmatmul.mubr.f32.gmra.mxu0 %v235
  %v318 = vpop.f32.mrf.mxu0
  %v319 = vadd.f32 %v231, %v318
  %v320 = vpop.f32.mrf.mxu0
  %321 = vmatprep.mubr.f32.mxu0 0.0
  %322 = vmatmul.mubr.f32.gmra.mxu0 %v238
  %v323 = vpop.f32.mrf.mxu0
  %v324 = vadd.f32 %v231, %v323
  %v325 = vpop.f32.mrf.mxu0
  %326 = vmatprep.mubr.f32.mxu0 0.0
  %327 = vmatmul.mubr.f32.gmra.mxu0 %v241
  %v328 = vpop.f32.mrf.mxu0
  %v329 = vadd.f32 %v231, %v328
  %v330 = vpop.f32.mrf.mxu0
  %331 = vmatprep.mubr.f32.mxu0 0.0
  %332 = vmatmul.mubr.f32.gmra.mxu0 %v244
  %v333 = vpop.f32.mrf.mxu0
  %v334 = vadd.f32 %v231, %v333
  %v335 = vpop.f32.mrf.mxu0
  %336 = vmatprep.mubr.f32.mxu0 0.0
  %337 = vmatmul.mubr.f32.gmra.mxu0 %v247
  %v338 = vpop.f32.mrf.mxu0
  %v339 = vadd.f32 %v231, %v338
  %v340 = vpop.f32.mrf.mxu0
  %341 = vmatprep.mubr.f32.mxu0 0.0
  %342 = vmatmul.mubr.f32.gmra.mxu0 %v250
  %v343 = vpop.f32.mrf.mxu0
  %v344 = vadd.f32 %v231, %v343
  %v345 = vpop.f32.mrf.mxu0
  %346 = vdwg.mxu0
  %v347 = vld [vmem:[%s15] sm:$0x1]
  %vm348 = vcmp.gt.f32.partialorder %v319, 0.0
  %vm349 = vcmp.gt.f32.partialorder %v324, 0.0
  %vm350 = vcmp.gt.f32.partialorder %v329, 0.0
  %vm351 = vcmp.gt.f32.partialorder %v334, 0.0
  %vm352 = vcmp.gt.f32.partialorder %v339, 0.0
  %vm353 = vcmp.gt.f32.partialorder %v344, 0.0
  %v355 = vlaneseq
  %v356 = vshrl.u32 %v355, 7
  %v357 = vsub.s32 0, %v356
  %v358 = vrot.slane %v347, %v357
  %v360 = vmul.f32 %v358, %v319
  %v361 = vmul.f32 %v358, %v324
  %v362 = vmul.f32 %v358, %v329
  %v363 = vmul.f32 %v358, %v334
  %v364 = vmul.f32 %v358, %v339
  %v365 = vmul.f32 %v358, %v344
  %v366 = vsel %vm348, %v319, %v360
  %v367 = vsel %vm349, %v324, %v361
  %v368 = vsel %vm350, %v329, %v362
  %v369 = vsel %vm351, %v334, %v363
  %v370 = vsel %vm352, %v339, %v364
  %v371 = vsel %vm353, %v344, %v365
  %v372 = vld [vmem:[%s10] sm:$0xff]
  %v373 = vld [vmem:[%s10 + $0x8] sm:$0xff]
  %v374 = vld [vmem:[%s10 + $0x10] sm:$0xff]
  %v375 = vld [vmem:[%s10 + $0x18] sm:$0xff]
  %v376 = vld [vmem:[%s10 + $0x20] sm:$0xff]
  %v377 = vld [vmem:[%s10 + $0x28] sm:$0xff]
  %v378 = vld [vmem:[%s10 + $0x30] sm:$0xff]
  %v379 = vld [vmem:[%s10 + $0x38] sm:$0xff]
  %v380 = vld [vmem:[%s11] sm:$0x1]
  %v382 = vlaneseq
  %v383 = vshrl.u32 %v382, 7
  %v384 = vsub.s32 0, %v383
  %v385 = vrot.slane %v380, %v384
  %v388 = vsel %vm233, %v366, 0
  %v391 = vsel %vm233, %v367, 0
  %v394 = vsel %vm233, %v368, 0
  %v397 = vsel %vm233, %v369, 0
  %v400 = vsel %vm233, %v370, 0
  %v403 = vsel %vm233, %v371, 0
  %405 = vmatprep.subr.mxu0 0.0
  %406 = vmatpush1.msra.mxu0 0.0
  %407 = vmatprep.subr.mxu0 0.0
  %408 = vmatpush1.msra.mxu0 0.0
  %409 = vmatprep.subr.mxu0 0.0
  %410 = vmatpush1.msra.mxu0 0.0
  %411 = vmatprep.subr.mxu0 0.0
  %412 = vmatpush1.msra.mxu0 0.0
  %413 = vmatprep.subr.mxu0 0.0
  %414 = vmatpush1.msra.mxu0 0.0
  %415 = vmatprep.subr.mxu0 0.0
  %416 = vmatpush1.msra.mxu0 0.0
  %417 = vmatprep.subr.mxu0 0.0
  %418 = vmatpush1.msra.mxu0 0.0
  %419 = vmatprep.subr.mxu0 0.0
  %420 = vmatpush1.msra.mxu0 0.0
  %421 = vmatprep.subr.mxu0 0.0
  %422 = vmatpush1.msra.mxu0 %v379
  %423 = vmatprep.subr.mxu0 0.0
  %424 = vmatpush1.msra.mxu0 %v378
  %425 = vmatprep.subr.mxu0 0.0
  %426 = vmatpush1.msra.mxu0 %v377
  %427 = vmatprep.subr.mxu0 0.0
  %428 = vmatpush1.msra.mxu0 %v376
  %429 = vmatprep.subr.mxu0 0.0
  %430 = vmatpush1.msra.mxu0 %v375
  %431 = vmatprep.subr.mxu0 0.0
  %432 = vmatpush1.msra.mxu0 %v374
  %433 = vmatprep.subr.mxu0 0.0
  %434 = vmatpush1.msra.mxu0 %v373
  %435 = vmatprep.subr.mxu0 0.0
  %436 = vmatpush1.msra.mxu0 %v372
  %437 = vmatprep.subr.mxu0 0.0
  %438 = vmatpush2.msra.mxu0 0.0
  %439 = vmatprep.subr.mxu0 0.0
  %440 = vmatpush2.msra.mxu0 0.0
  %441 = vmatprep.subr.mxu0 0.0
  %442 = vmatpush2.msra.mxu0 0.0
  %443 = vmatprep.subr.mxu0 0.0
  %444 = vmatpush2.msra.mxu0 0.0
  %445 = vmatprep.subr.mxu0 0.0
  %446 = vmatpush2.msra.mxu0 0.0
  %447 = vmatprep.subr.mxu0 0.0
  %448 = vmatpush2.msra.mxu0 0.0
  %449 = vmatprep.subr.mxu0 0.0
  %450 = vmatpush2.msra.mxu0 0.0
  %451 = vmatprep.subr.mxu0 0.0
  %452 = vmatpush2.msra.mxu0 0.0
  %453 = vmatprep.subr.mxu0 0.0
  %454 = vmatpush2.msra.mxu0 0.0
  %455 = vmatprep.subr.mxu0 0.0
  %456 = vmatpush2.msra.mxu0 0.0
  %457 = vmatprep.subr.mxu0 0.0
  %458 = vmatpush2.msra.mxu0 0.0
  %459 = vmatprep.subr.mxu0 0.0
  %460 = vmatpush2.msra.mxu0 0.0
  %461 = vmatprep.subr.mxu0 0.0
  %462 = vmatpush2.msra.mxu0 0.0
  %463 = vmatprep.subr.mxu0 0.0
  %464 = vmatpush2.msra.mxu0 0.0
  %465 = vmatprep.subr.mxu0 0.0
  %466 = vmatpush2.msra.mxu0 0.0
  %467 = vmatprep.subr.mxu0 0.0
  %468 = vmatpush2.msra.mxu0 0.0
  %469 = vmatprep.mubr.f32.mxu0 0.0
  %470 = vmatmul.mubr.f32.gmra.mxu0 %v388
  %v471 = vpop.f32.mrf.mxu0
  %v472 = vadd.f32 %v385, %v471
  %v473 = vpop.f32.mrf.mxu0
  %474 = vmatprep.mubr.f32.mxu0 0.0
  %475 = vmatmul.mubr.f32.gmra.mxu0 %v391
  %v476 = vpop.f32.mrf.mxu0
  %v477 = vadd.f32 %v385, %v476
  %v478 = vpop.f32.mrf.mxu0
  %479 = vmatprep.mubr.f32.mxu0 0.0
  %480 = vmatmul.mubr.f32.gmra.mxu0 %v394
  %v481 = vpop.f32.mrf.mxu0
  %v482 = vadd.f32 %v385, %v481
  %v483 = vpop.f32.mrf.mxu0
  %484 = vmatprep.mubr.f32.mxu0 0.0
  %485 = vmatmul.mubr.f32.gmra.mxu0 %v397
  %v486 = vpop.f32.mrf.mxu0
  %v487 = vadd.f32 %v385, %v486
  %v488 = vpop.f32.mrf.mxu0
  %489 = vmatprep.mubr.f32.mxu0 0.0
  %490 = vmatmul.mubr.f32.gmra.mxu0 %v400
  %v491 = vpop.f32.mrf.mxu0
  %v492 = vadd.f32 %v385, %v491
  %v493 = vpop.f32.mrf.mxu0
  %494 = vmatprep.mubr.f32.mxu0 0.0
  %495 = vmatmul.mubr.f32.gmra.mxu0 %v403
  %v496 = vpop.f32.mrf.mxu0
  %v497 = vadd.f32 %v385, %v496
  %v498 = vpop.f32.mrf.mxu0
  %499 = vdwg.mxu0
  %v500 = vld [vmem:[%s16] sm:$0x1]
  %vm501 = vcmp.gt.f32.partialorder %v472, 0.0
  %vm502 = vcmp.gt.f32.partialorder %v477, 0.0
  %vm503 = vcmp.gt.f32.partialorder %v482, 0.0
  %vm504 = vcmp.gt.f32.partialorder %v487, 0.0
  %vm505 = vcmp.gt.f32.partialorder %v492, 0.0
  %vm506 = vcmp.gt.f32.partialorder %v497, 0.0
  %v508 = vlaneseq
  %v509 = vshrl.u32 %v508, 7
  %v510 = vsub.s32 0, %v509
  %v511 = vrot.slane %v500, %v510
  %v513 = vmul.f32 %v511, %v472
  %v514 = vmul.f32 %v511, %v477
  %v515 = vmul.f32 %v511, %v482
  %v516 = vmul.f32 %v511, %v487
  %v517 = vmul.f32 %v511, %v492
  %v518 = vmul.f32 %v511, %v497
  %v519 = vsel %vm501, %v472, %v513
  %v520 = vsel %vm502, %v477, %v514
  %v521 = vsel %vm503, %v482, %v515
  %v522 = vsel %vm504, %v487, %v516
  %v523 = vsel %vm505, %v492, %v517
  %v524 = vsel %vm506, %v497, %v518
  %v525 = vld [vmem:[%s12] sm:$0xff]
  %v526 = vld [vmem:[%s12 + $0x8] sm:$0xff]
  %v527 = vld [vmem:[%s12 + $0x10] sm:$0xff]
  %v528 = vld [vmem:[%s12 + $0x18] sm:$0xff]
  %v529 = vld [vmem:[%s12 + $0x20] sm:$0xff]
  %v530 = vld [vmem:[%s12 + $0x28] sm:$0xff]
  %v531 = vld [vmem:[%s12 + $0x30] sm:$0xff]
  %v532 = vld [vmem:[%s12 + $0x38] sm:$0xff]
  %v533 = vld [vmem:[%s13] sm:$0x1]
  %v535 = vlaneseq
  %v536 = vshrl.u32 %v535, 7
  %v537 = vsub.s32 0, %v536
  %v538 = vrot.slane %v533, %v537
  %v541 = vsel %vm233, %v519, 0
  %v544 = vsel %vm233, %v520, 0
  %v547 = vsel %vm233, %v521, 0
  %v550 = vsel %vm233, %v522, 0
  %v553 = vsel %vm233, %v523, 0
  %v556 = vsel %vm233, %v524, 0
  %558 = vmatprep.subr.mxu0 0.0
  %559 = vmatpush1.msra.mxu0 0.0
  %560 = vmatprep.subr.mxu0 0.0
  %561 = vmatpush1.msra.mxu0 0.0
  %562 = vmatprep.subr.mxu0 0.0
  %563 = vmatpush1.msra.mxu0 0.0
  %564 = vmatprep.subr.mxu0 0.0
  %565 = vmatpush1.msra.mxu0 0.0
  %566 = vmatprep.subr.mxu0 0.0
  %567 = vmatpush1.msra.mxu0 0.0
  %568 = vmatprep.subr.mxu0 0.0
  %569 = vmatpush1.msra.mxu0 0.0
  %570 = vmatprep.subr.mxu0 0.0
  %571 = vmatpush1.msra.mxu0 0.0
  %572 = vmatprep.subr.mxu0 0.0
  %573 = vmatpush1.msra.mxu0 0.0
  %574 = vmatprep.subr.mxu0 0.0
  %575 = vmatpush1.msra.mxu0 %v532
  %576 = vmatprep.subr.mxu0 0.0
  %577 = vmatpush1.msra.mxu0 %v531
  %578 = vmatprep.subr.mxu0 0.0
  %579 = vmatpush1.msra.mxu0 %v530
  %580 = vmatprep.subr.mxu0 0.0
  %581 = vmatpush1.msra.mxu0 %v529
  %582 = vmatprep.subr.mxu0 0.0
  %583 = vmatpush1.msra.mxu0 %v528
  %584 = vmatprep.subr.mxu0 0.0
  %585 = vmatpush1.msra.mxu0 %v527
  %586 = vmatprep.subr.mxu0 0.0
  %587 = vmatpush1.msra.mxu0 %v526
  %588 = vmatprep.subr.mxu0 0.0
  %589 = vmatpush1.msra.mxu0 %v525
  %590 = vmatprep.subr.mxu0 0.0
  %591 = vmatpush2.msra.mxu0 0.0
  %592 = vmatprep.subr.mxu0 0.0
  %593 = vmatpush2.msra.mxu0 0.0
  %594 = vmatprep.subr.mxu0 0.0
  %595 = vmatpush2.msra.mxu0 0.0
  %596 = vmatprep.subr.mxu0 0.0
  %597 = vmatpush2.msra.mxu0 0.0
  %598 = vmatprep.subr.mxu0 0.0
  %599 = vmatpush2.msra.mxu0 0.0
  %600 = vmatprep.subr.mxu0 0.0
  %601 = vmatpush2.msra.mxu0 0.0
  %602 = vmatprep.subr.mxu0 0.0
  %603 = vmatpush2.msra.mxu0 0.0
  %604 = vmatprep.subr.mxu0 0.0
  %605 = vmatpush2.msra.mxu0 0.0
  %606 = vmatprep.subr.mxu0 0.0
  %607 = vmatpush2.msra.mxu0 0.0
  %608 = vmatprep.subr.mxu0 0.0
  %609 = vmatpush2.msra.mxu0 0.0
  %610 = vmatprep.subr.mxu0 0.0
  %611 = vmatpush2.msra.mxu0 0.0
  %612 = vmatprep.subr.mxu0 0.0
  %613 = vmatpush2.msra.mxu0 0.0
  %614 = vmatprep.subr.mxu0 0.0
  %615 = vmatpush2.msra.mxu0 0.0
  %616 = vmatprep.subr.mxu0 0.0
  %617 = vmatpush2.msra.mxu0 0.0
  %618 = vmatprep.subr.mxu0 0.0
  %619 = vmatpush2.msra.mxu0 0.0
  %620 = vmatprep.subr.mxu0 0.0
  %621 = vmatpush2.msra.mxu0 0.0
  %622 = vmatprep.mubr.f32.mxu0 0.0
  %623 = vmatmul.mubr.f32.gmra.mxu0 %v541
  %v624 = vpop.f32.mrf.mxu0
  %v625 = vadd.f32 %v538, %v624
  %v626 = vpop.f32.mrf.mxu0
  %627 = vmatprep.mubr.f32.mxu0 0.0
  %628 = vmatmul.mubr.f32.gmra.mxu0 %v544
  %v629 = vpop.f32.mrf.mxu0
  %v630 = vadd.f32 %v538, %v629
  %v631 = vpop.f32.mrf.mxu0
  %632 = vmatprep.mubr.f32.mxu0 0.0
  %633 = vmatmul.mubr.f32.gmra.mxu0 %v547
  %v634 = vpop.f32.mrf.mxu0
  %v635 = vadd.f32 %v538, %v634
  %v636 = vpop.f32.mrf.mxu0
  %637 = vmatprep.mubr.f32.mxu0 0.0
  %638 = vmatmul.mubr.f32.gmra.mxu0 %v550
  %v639 = vpop.f32.mrf.mxu0
  %v640 = vadd.f32 %v538, %v639
  %v641 = vpop.f32.mrf.mxu0
  %642 = vmatprep.mubr.f32.mxu0 0.0
  %643 = vmatmul.mubr.f32.gmra.mxu0 %v553
  %v644 = vpop.f32.mrf.mxu0
  %v645 = vadd.f32 %v538, %v644
  %v646 = vpop.f32.mrf.mxu0
  %647 = vmatprep.mubr.f32.mxu0 0.0
  %648 = vmatmul.mubr.f32.gmra.mxu0 %v556
  %v649 = vpop.f32.mrf.mxu0
  %v650 = vadd.f32 %v538, %v649
  %v651 = vpop.f32.mrf.mxu0
  %652 = vdwg.mxu0
  %v653 = vld [vmem:[%s1] sm:$0xff]
  %v654 = vld [vmem:[%s1 + $0x8] sm:$0xff]
  %v655 = vld [vmem:[%s1 + $0x10] sm:$0xff]
  %v656 = vld [vmem:[%s1 + $0x18] sm:$0xff]
  %v657 = vld [vmem:[%s1 + $0x20] sm:$0xff]
  %v658 = vld [vmem:[%s1 + $0x28] sm:$0xff]
  %v659 = vld [vmem:[%s2] sm:$0xff]
  %v660 = vld [vmem:[%s2 + $0x8] sm:$0xff]
  %v661 = vld [vmem:[%s2 + $0x10] sm:$0xff]
  %v662 = vld [vmem:[%s2 + $0x18] sm:$0xff]
  %v663 = vld [vmem:[%s2 + $0x20] sm:$0xff]
  %v664 = vld [vmem:[%s2 + $0x28] sm:$0xff]
  %v665 = vmul.f32 %v653, %v625
  %v666 = vmul.f32 %v654, %v630
  %v667 = vmul.f32 %v655, %v635
  %v668 = vmul.f32 %v656, %v640
  %v669 = vmul.f32 %v657, %v645
  %v670 = vmul.f32 %v658, %v650
  %677 = vrot.lane.b32.xlu0 %v625, 112
  %v678 = vpop.permute.xlu0 %677
  %679 = vrot.lane.b32.xlu0 %v630, 112
  %v680 = vpop.permute.xlu0 %679
  %681 = vrot.lane.b32.xlu0 %v635, 112
  %v682 = vpop.permute.xlu0 %681
  %683 = vrot.lane.b32.xlu0 %v640, 112
  %v684 = vpop.permute.xlu0 %683
  %685 = vrot.lane.b32.xlu0 %v645, 112
  %v686 = vpop.permute.xlu0 %685
  %687 = vrot.lane.b32.xlu0 %v650, 112
  %v688 = vpop.permute.xlu0 %687
  %v695 = vmul.f32 %v659, %v678
  %v696 = vmul.f32 %v660, %v680
  %v697 = vmul.f32 %v661, %v682
  %v698 = vmul.f32 %v662, %v684
  %v699 = vmul.f32 %v663, %v686
  %v700 = vmul.f32 %v664, %v688
  %v701 = vsub.f32 %v665, %v695
  %v702 = vsub.f32 %v666, %v696
  %v703 = vsub.f32 %v667, %v697
  %v704 = vsub.f32 %v668, %v698
  %v705 = vsub.f32 %v669, %v699
  %v706 = vsub.f32 %v670, %v700
  %v707 = vmul.f32 %v659, %v625
  %v708 = vmul.f32 %v660, %v630
  %v709 = vmul.f32 %v661, %v635
  %v710 = vmul.f32 %v662, %v640
  %v711 = vmul.f32 %v663, %v645
  %v712 = vmul.f32 %v664, %v650
  %v713 = vmul.f32 %v653, %v678
  %v714 = vmul.f32 %v654, %v680
  %v715 = vmul.f32 %v655, %v682
  %v716 = vmul.f32 %v656, %v684
  %v717 = vmul.f32 %v657, %v686
  %v718 = vmul.f32 %v658, %v688
  %v719 = vadd.f32 %v707, %v713
  %v720 = vadd.f32 %v708, %v714
  %v721 = vadd.f32 %v709, %v715
  %v722 = vadd.f32 %v710, %v716
  %v723 = vadd.f32 %v711, %v717
  %v724 = vadd.f32 %v712, %v718
  %731 = vrot.lane.b32.xlu0 %v719, 16
  %v732 = vpop.permute.xlu0 %731
  %733 = vrot.lane.b32.xlu0 %v720, 16
  %v734 = vpop.permute.xlu0 %733
  %735 = vrot.lane.b32.xlu0 %v721, 16
  %v736 = vpop.permute.xlu0 %735
  %737 = vrot.lane.b32.xlu0 %v722, 16
  %v738 = vpop.permute.xlu0 %737
  %739 = vrot.lane.b32.xlu0 %v723, 16
  %v740 = vpop.permute.xlu0 %739
  %741 = vrot.lane.b32.xlu0 %v724, 16
  %v742 = vpop.permute.xlu0 %741
  %vm749 = vcmask 130048
  %v750 = vsel %vm749, %v701, %v732
  %v751 = vsel %vm749, %v702, %v734
  %v752 = vsel %vm749, %v703, %v736
  %v753 = vsel %vm749, %v704, %v738
  %v754 = vsel %vm749, %v705, %v740
  %v755 = vsel %vm749, %v706, %v742
  %v756 = vld [vmem:[%s3] sm:$0xf]
  %v757 = vld [vmem:[%s3 + $0x4] sm:$0xf]
  %v758 = vunpack.c.l.bf16 %v756
  %v759 = vunpack.c.l.bf16 %v757
  %vm760 = vcmask 392192
  %v762 = vsel %vm760, %v758, 0
  %v765 = vsel %vm760, %v759, 0
  %767 = vmatprep.subr.mxu0 0.0
  %768 = vmatpush1.msra.mxu0 0.0
  %769 = vmatprep.subr.mxu0 0.0
  %770 = vmatpush1.msra.mxu0 0.0
  %771 = vmatprep.subr.mxu0 0.0
  %772 = vmatpush1.msra.mxu0 0.0
  %773 = vmatprep.subr.mxu0 0.0
  %774 = vmatpush1.msra.mxu0 0.0
  %775 = vmatprep.subr.mxu0 0.0
  %776 = vmatpush1.msra.mxu0 0.0
  %777 = vmatprep.subr.mxu0 0.0
  %778 = vmatpush1.msra.mxu0 0.0
  %779 = vmatprep.subr.mxu0 0.0
  %780 = vmatpush1.msra.mxu0 0.0
  %781 = vmatprep.subr.mxu0 0.0
  %782 = vmatpush1.msra.mxu0 0.0
  %783 = vmatprep.subr.mxu0 0.0
  %784 = vmatpush1.msra.mxu0 0.0
  %785 = vmatprep.subr.mxu0 0.0
  %786 = vmatpush1.msra.mxu0 0.0
  %787 = vmatprep.subr.mxu0 0.0
  %788 = vmatpush1.msra.mxu0 %v755
  %789 = vmatprep.subr.mxu0 0.0
  %790 = vmatpush1.msra.mxu0 %v754
  %791 = vmatprep.subr.mxu0 0.0
  %792 = vmatpush1.msra.mxu0 %v753
  %793 = vmatprep.subr.mxu0 0.0
  %794 = vmatpush1.msra.mxu0 %v752
  %795 = vmatprep.subr.mxu0 0.0
  %796 = vmatpush1.msra.mxu0 %v751
  %797 = vmatprep.subr.mxu0 0.0
  %798 = vmatpush1.msra.mxu0 %v750
  %799 = vmatprep.subr.mxu0 0.0
  %800 = vmatpush2.msra.mxu0 0.0
  %801 = vmatprep.subr.mxu0 0.0
  %802 = vmatpush2.msra.mxu0 0.0
  %803 = vmatprep.subr.mxu0 0.0
  %804 = vmatpush2.msra.mxu0 0.0
  %805 = vmatprep.subr.mxu0 0.0
  %806 = vmatpush2.msra.mxu0 0.0
  %807 = vmatprep.subr.mxu0 0.0
  %808 = vmatpush2.msra.mxu0 0.0
  %809 = vmatprep.subr.mxu0 0.0
  %810 = vmatpush2.msra.mxu0 0.0
  %811 = vmatprep.subr.mxu0 0.0
  %812 = vmatpush2.msra.mxu0 0.0
  %813 = vmatprep.subr.mxu0 0.0
  %814 = vmatpush2.msra.mxu0 0.0
  %815 = vmatprep.subr.mxu0 0.0
  %816 = vmatpush2.msra.mxu0 0.0
  %817 = vmatprep.subr.mxu0 0.0
  %818 = vmatpush2.msra.mxu0 0.0
  %819 = vmatprep.subr.mxu0 0.0
  %820 = vmatpush2.msra.mxu0 0.0
  %821 = vmatprep.subr.mxu0 0.0
  %822 = vmatpush2.msra.mxu0 0.0
  %823 = vmatprep.subr.mxu0 0.0
  %824 = vmatpush2.msra.mxu0 0.0
  %825 = vmatprep.subr.mxu0 0.0
  %826 = vmatpush2.msra.mxu0 0.0
  %827 = vmatprep.subr.mxu0 0.0
  %828 = vmatpush2.msra.mxu0 0.0
  %829 = vmatprep.subr.mxu0 0.0
  %830 = vmatpush2.msra.mxu0 0.0
  %831 = vmatprep.mubr.f32.mxu0 0.0
  %832 = vmatmul.mubr.f32.gmra.mxu0 %v762
  %v833 = vpop.f32.mrf.mxu0
  %v834 = vadd.f32 0.0, %v833
  %v835 = vpop.f32.mrf.mxu0
  %836 = vmatprep.mubr.f32.mxu0 0.0
  %837 = vmatmul.mubr.f32.gmra.mxu0 %v765
  %v838 = vpop.f32.mrf.mxu0
  %v839 = vadd.f32 0.0, %v838
  %v840 = vpop.f32.mrf.mxu0
  %841 = vdwg.mxu0
  %844 = vrot.lane.b32.xlu0 %v834, 124
  %v845 = vpop.permute.xlu0 %844
  %846 = vrot.lane.b32.xlu0 %v839, 124
  %v847 = vpop.permute.xlu0 %846
  %v850 = vadd.f32 %v834, %v845
  %v851 = vadd.f32 %v839, %v847
  %852 = vrot.lane.b32.xlu0 %v834, 120
  %v853 = vpop.permute.xlu0 %852
  %854 = vrot.lane.b32.xlu0 %v839, 120
  %v855 = vpop.permute.xlu0 %854
  %v858 = vadd.f32 %v850, %v853
  %v859 = vadd.f32 %v851, %v855
  %860 = vrot.lane.b32.xlu0 %v834, 116
  %v861 = vpop.permute.xlu0 %860
  %862 = vrot.lane.b32.xlu0 %v839, 116
  %v863 = vpop.permute.xlu0 %862
  %v866 = vadd.f32 %v858, %v861
  %v867 = vadd.f32 %v859, %v863
  %870 = vrot.lane.b32.xlu0 %v866, 116
  %v871 = vpop.permute.xlu0 %870
  %872 = vrot.lane.b32.xlu0 %v867, 116
  %v873 = vpop.permute.xlu0 %872
  %vm876 = vcmask 31744
  %v877 = vsel %vm876, %v866, %v871
  %v878 = vsel %vm876, %v867, %v873
  %v879 = vld [vmem:[%s4] sm:$0xff]
  %v880 = vld [vmem:[%s4 + $0x8] sm:$0xff]
  %882 = vset.pattern.permute.xlu0 0
  %883 = vperm.xlu0 %882, %v879
  %v884 = vpop.permute.xlu0 %883
  %887 = vset.pattern.permute.xlu0 0
  %888 = vperm.xlu0 %887, %v880
  %v889 = vpop.permute.xlu0 %888
  %v891 = vmul.f32 %v877, %v884
  %v892 = vmul.f32 %v878, %v889
  %v893 = vld [vmem:[%s5] sm:$0xff]
  %v894 = vld [vmem:[%s5 + $0x8] sm:$0xff]
  %v895 = vld [vmem:[%s17] sm:$0xff]
  %v897 = vsel %vm79, %v893, 0
  %v900 = vsel %vm79, %v894, 0
  %902 = vmatprep.subr.mxu0 0.0
  %903 = vmatpush1.msra.mxu0 0.0
  %904 = vmatprep.subr.mxu0 0.0
  %905 = vmatpush1.msra.mxu0 0.0
  %906 = vmatprep.subr.mxu0 0.0
  %907 = vmatpush1.msra.mxu0 0.0
  %908 = vmatprep.subr.mxu0 0.0
  %909 = vmatpush1.msra.mxu0 0.0
  %910 = vmatprep.subr.mxu0 0.0
  %911 = vmatpush1.msra.mxu0 0.0
  %912 = vmatprep.subr.mxu0 0.0
  %913 = vmatpush1.msra.mxu0 0.0
  %914 = vmatprep.subr.mxu0 0.0
  %915 = vmatpush1.msra.mxu0 0.0
  %916 = vmatprep.subr.mxu0 0.0
  %917 = vmatpush1.msra.mxu0 0.0
  %918 = vmatprep.subr.mxu0 0.0
  %919 = vmatpush1.msra.mxu0 0.0
  %920 = vmatprep.subr.mxu0 0.0
  %921 = vmatpush1.msra.mxu0 0.0
  %922 = vmatprep.subr.mxu0 0.0
  %923 = vmatpush1.msra.mxu0 0.0
  %924 = vmatprep.subr.mxu0 0.0
  %925 = vmatpush1.msra.mxu0 0.0
  %926 = vmatprep.subr.mxu0 0.0
  %927 = vmatpush1.msra.mxu0 0.0
  %928 = vmatprep.subr.mxu0 0.0
  %929 = vmatpush1.msra.mxu0 0.0
  %930 = vmatprep.subr.mxu0 0.0
  %931 = vmatpush1.msra.mxu0 0.0
  %932 = vmatprep.subr.mxu0 0.0
  %933 = vmatpush1.msra.mxu0 %v895
  %934 = vmatprep.subr.mxu0 0.0
  %935 = vmatpush2.msra.mxu0 0.0
  %936 = vmatprep.subr.mxu0 0.0
  %937 = vmatpush2.msra.mxu0 0.0
  %938 = vmatprep.subr.mxu0 0.0
  %939 = vmatpush2.msra.mxu0 0.0
  %940 = vmatprep.subr.mxu0 0.0
  %941 = vmatpush2.msra.mxu0 0.0
  %942 = vmatprep.subr.mxu0 0.0
  %943 = vmatpush2.msra.mxu0 0.0
  %944 = vmatprep.subr.mxu0 0.0
  %945 = vmatpush2.msra.mxu0 0.0
  %946 = vmatprep.subr.mxu0 0.0
  %947 = vmatpush2.msra.mxu0 0.0
  %948 = vmatprep.subr.mxu0 0.0
  %949 = vmatpush2.msra.mxu0 0.0
  %950 = vmatprep.subr.mxu0 0.0
  %951 = vmatpush2.msra.mxu0 0.0
  %952 = vmatprep.subr.mxu0 0.0
  %953 = vmatpush2.msra.mxu0 0.0
  %954 = vmatprep.subr.mxu0 0.0
  %955 = vmatpush2.msra.mxu0 0.0
  %956 = vmatprep.subr.mxu0 0.0
  %957 = vmatpush2.msra.mxu0 0.0
  %958 = vmatprep.subr.mxu0 0.0
  %959 = vmatpush2.msra.mxu0 0.0
  %960 = vmatprep.subr.mxu0 0.0
  %961 = vmatpush2.msra.mxu0 0.0
  %962 = vmatprep.subr.mxu0 0.0
  %963 = vmatpush2.msra.mxu0 0.0
  %964 = vmatprep.subr.mxu0 0.0
  %965 = vmatpush2.msra.mxu0 0.0
  %966 = vmatprep.mubr.f32.mxu0 0.0
  %967 = vmatmul.mubr.f32.gmra.mxu0 %v897
  %v968 = vpop.f32.mrf.mxu0
  %v969 = vadd.f32 0.0, %v968
  %v970 = vpop.f32.mrf.mxu0
  %971 = vmatprep.mubr.f32.mxu0 0.0
  %972 = vmatmul.mubr.f32.gmra.mxu0 %v900
  %v973 = vpop.f32.mrf.mxu0
  %v974 = vadd.f32 0.0, %v973
  %v975 = vpop.f32.mrf.mxu0
  %976 = vdwg.mxu0
  %v977 = vadd.f32 %v891, %v969
  %v978 = vadd.f32 %v892, %v974
  %v979 = vld [vmem:[%s18] sm:$0x1]
  %v981 = vlaneseq
  %v982 = vshrl.u32 %v981, 7
  %v983 = vsub.s32 0, %v982
  %v984 = vrot.slane %v979, %v983
  %v986 = vadd.f32 %v977, %v984
  %v987 = vadd.f32 %v978, %v984
  %v988 = vld [vmem:[%s19] sm:$0x1]
  %vm989 = vcmp.gt.f32.partialorder %v986, 0.0
  %vm990 = vcmp.gt.f32.partialorder %v987, 0.0
  %v992 = vlaneseq
  %v993 = vshrl.u32 %v992, 7
  %v994 = vsub.s32 0, %v993
  %v995 = vrot.slane %v988, %v994
  %v997 = vmul.f32 %v995, %v986
  %v998 = vmul.f32 %v995, %v987
  %v999 = vsel %vm989, %v986, %v997
  %v1000 = vsel %vm990, %v987, %v998
  %1001 = vst.msk [vmem:[%s20] sm:$0xff] %vm79, %v999
  %1002 = vst.msk [vmem:[%s20 + $0x8] sm:$0xff] %vm79, %v1000
  // Predicated region
  $region82: #{tpu_custom_call.1} parent=0 // pred_check
    _
  $region83: #{tpu_custom_call.1} parent=0 // pred_check_branch
    %1004 = sbr.rel (0) target = $region85
  $region84: #{tpu_custom_call.1} parent=0 // pred_region
    _
  $region85: #{tpu_custom_call.1} parent=0 // pred_fallthru
    _
  // Predicated region
  $region86: #{tpu_custom_call.1} parent=0 // pred_check
    _
  $region87: #{tpu_custom_call.1} parent=0 // pred_check_branch
    %1006 = sbr.rel (0) target = $region89
  $region88: #{tpu_custom_call.1} parent=0 // pred_region
    _
  $region89: #{tpu_custom_call.1} parent=0 // pred_fallthru
    _

</llo_original>
